<compile_context>
chip_gen: v6e
topology: v6e:2x2x1
jax: 0.10.0
libtpu: 0.0.40
codegen_flags: <defaults>
</compile_context>

<pallas_src>
import jax
import jax.numpy as jnp
from jax.experimental import pallas as pl
from jax.experimental.pallas import tpu as pltpu
from functools import partial


# ----------------------------- configuration --------------------------------
# cfg_shape_net = {input_dim: 2, output_dim: 3, hidden_units: [32, 32]}
# cfg_param_net = {input_dim: 3, generated_unit: 16, hidden_units: [32, 32]}
SHAPE_I_DIM = 2
SHAPE_O_DIM = 3
SHAPE_HIDDEN = (32, 32)

PARAM_I_DIM = 3
GEN_UNIT = 16
PARAM_HIDDEN = (32, 32)

LATENT_DIM = SHAPE_I_DIM * GEN_UNIT + GEN_UNIT   # generated W + generated b
D_IN = SHAPE_I_DIM + PARAM_I_DIM                 # column split of the input

BATCH = 64
DEFAULT_BLOCK_B = 256                            # batch rows per grid step
LANES = 128                                      # slab lane width (one vreg)


# ------------------------- packed weight-slab layout -------------------------
# Each sub-tensor lives at lane 0 of its own row-range; row offsets are padded
# to multiples of 8 so every kernel-side static slice is tile-aligned.
def _slab_layout():
    entries = [
        ("pW0", PARAM_I_DIM,      PARAM_HIDDEN[0]),
        ("pb0", 1,                PARAM_HIDDEN[0]),
        ("pW1", PARAM_HIDDEN[0],  PARAM_HIDDEN[1]),
        ("pb1", 1,                PARAM_HIDDEN[1]),
        ("pWf", PARAM_HIDDEN[1],  LATENT_DIM),     # fused final param-net layer
        ("pbf", 1,                LATENT_DIM),
        ("sW0", GEN_UNIT,         SHAPE_HIDDEN[0]),
        ("sb0", 1,                SHAPE_HIDDEN[0]),
        ("sW1", SHAPE_HIDDEN[0],  SHAPE_HIDDEN[1]),
        ("sb1", 1,                SHAPE_HIDDEN[1]),
        ("sWo", SHAPE_HIDDEN[1],  SHAPE_O_DIM),
        ("sbo", 1,                SHAPE_O_DIM),
    ]
    layout, row = {}, 0
    for name, r, c in entries:
        layout[name] = (row, r, c)
        row += ((r + 7) // 8) * 8                 # pad each block to 8 sublanes
    return layout, row


SLAB_LAYOUT, SLAB_ROWS = _slab_layout()           # 200 rows x 128 lanes ~= 100 KB


def pack_params(params):
    """One-time preprocessing (hoisted out of the jitted hot path).

    Fuses the final param-net layer into a single [ph, si*gu + gu] matmul whose
    columns are [ genW(:, s=0) | genW(:, s=1) | genB ] and packs every weight /
    bias into one tile-aligned f32 slab.
    """
    (pW0, pb0, pW1, pb1, pWl, pbl,
     sW0, sb0, sW1, sb1, sWo, sbo) = params

    ph = PARAM_HIDDEN[-1]
    Wg = pWl[:, :GEN_UNIT * SHAPE_I_DIM].reshape(ph, GEN_UNIT, SHAPE_I_DIM)
    bg = pbl[:, :GEN_UNIT * SHAPE_I_DIM].reshape(1, GEN_UNIT, SHAPE_I_DIM)
    pWf = jnp.concatenate([Wg[:, :, s] for s in range(SHAPE_I_DIM)]
                          + [pWl[:, GEN_UNIT * SHAPE_I_DIM:]], axis=1)   # [ph, 48]
    pbf = jnp.concatenate([bg[:, :, s] for s in range(SHAPE_I_DIM)]
                          + [pbl[:, GEN_UNIT * SHAPE_I_DIM:]], axis=1)   # [1, 48]

    tensors = {"pW0": pW0, "pb0": pb0, "pW1": pW1, "pb1": pb1,
               "pWf": pWf, "pbf": pbf, "sW0": sW0, "sb0": sb0,
               "sW1": sW1, "sb1": sb1, "sWo": sWo, "sbo": sbo}

    slab = jnp.zeros((SLAB_ROWS, LANES), jnp.float32)
    for name, t in tensors.items():
        r0, nr, nc = SLAB_LAYOUT[name]
        assert t.shape == (nr, nc), (name, t.shape, (nr, nc))
        slab = slab.at[r0:r0 + nr, 0:nc].set(t.astype(jnp.float32))
    return slab


# ------------------------------- the kernel ---------------------------------
def nif_kernel(x_ref, slab_ref, o_ref):
    def w(name):                                   # weight view (static slice)
        r0, nr, nc = SLAB_LAYOUT[name]
        return slab_ref[r0:r0 + nr, 0:nc]

    def b(name):                                   # bias row (broadcast add)
        r0, _, nc = SLAB_LAYOUT[name]
        return slab_ref[r0:r0 + 1, 0:nc]

    x = x_ref[...]                                 # [B, si + pi]
    shape_in = x[:, 0:SHAPE_I_DIM]                 # [B, si]
    param_in = x[:, SHAPE_I_DIM:D_IN]              # [B, pi] (tiny lane shift, XLU)

    # ---- parameter (hyper) network: Linear -> tanh, Linear -> tanh ----
    h = jnp.tanh(jnp.dot(param_in, w("pW0"),
                         preferred_element_type=jnp.float32) + b("pb0"))
    h = jnp.tanh(jnp.dot(h, w("pW1"),
                         preferred_element_type=jnp.float32) + b("pb1"))

    # ---- fused final param-net layer: ONE matmul + ONE tanh.
    # Column layout (prepared by pack_params):
    #   [ genW(:, s=0) | genW(:, s=1) | genB ]  each GEN_UNIT lanes wide.
    lat = jnp.tanh(jnp.dot(h, w("pWf"),
                           preferred_element_type=jnp.float32) + b("pbf"))

    # generated layer: out[b,g] = tanh( sum_s genW[b,g,s]*shape_in[b,s] + genB[b,g] )
    acc = lat[:, SHAPE_I_DIM * GEN_UNIT:LATENT_DIM]        # generated bias [B, gu]
    for s in range(SHAPE_I_DIM):                            # tiny, statically unrolled
        acc = acc + lat[:, s * GEN_UNIT:(s + 1) * GEN_UNIT] * shape_in[:, s:s + 1]
    out = jnp.tanh(acc)                                     # shape_activation

    # ---- shape network: every layer followed by tanh (including the last) ----
    out = jnp.tanh(jnp.dot(out, w("sW0"),
                           preferred_element_type=jnp.float32) + b("sb0"))
    out = jnp.tanh(jnp.dot(out, w("sW1"),
                           preferred_element_type=jnp.float32) + b("sb1"))
    out = jnp.tanh(jnp.dot(out, w("sWo"),
                           preferred_element_type=jnp.float32) + b("sbo"))

    o_ref[...] = out.astype(o_ref.dtype)


# ------------------------------- the wrapper ---------------------------------
@partial(jax.jit, static_argnames=("block_b",))
def nif_forward(x, slab, block_b=DEFAULT_BLOCK_B):
    """x: [B, SHAPE_I_DIM + PARAM_I_DIM] f32, slab: packed weights -> [B, SHAPE_O_DIM]."""
    B = x.shape[0]
    block_b = min(block_b, B)
    assert B % block_b == 0 and block_b % 8 == 0, (B, block_b)
    grid = (B // block_b,)

    return pl.pallas_call(
        nif_kernel,
        out_shape=jax.ShapeDtypeStruct((B, SHAPE_O_DIM), jnp.float32),
        grid=grid,
        in_specs=[
            pl.BlockSpec((block_b, D_IN), lambda i: (i, 0)),        # batch tile of x
            pl.BlockSpec((SLAB_ROWS, LANES), lambda i: (0, 0)),     # weights: resident
        ],
        out_specs=pl.BlockSpec((block_b, SHAPE_O_DIM), lambda i: (i, 0)),
        compiler_params=pltpu.CompilerParams(
            dimension_semantics=("parallel",)),                     # megacore on v7x
    )(x, slab)


# --------------------------- pure-JAX reference ------------------------------
def nif_reference(x, params):
    (pW0, pb0, pW1, pb1, pWl, pbl,
     sW0, sb0, sW1, sb1, sWo, sbo) = params
    shape_in = x[:, :SHAPE_I_DIM]
    param_in = x[:, SHAPE_I_DIM:]

    h = jnp.tanh(param_in @ pW0 + pb0)
    h = jnp.tanh(h @ pW1 + pb1)
    latent = jnp.tanh(h @ pWl + pbl)                    # [B, LATENT_DIM]

    gW = latent[:, :GEN_UNIT * SHAPE_I_DIM].reshape(-1, GEN_UNIT, SHAPE_I_DIM)
    gb = latent[:, GEN_UNIT * SHAPE_I_DIM:]
    out = jnp.tanh(jnp.einsum('bgs,bs->bg', gW, shape_in) + gb)

    out = jnp.tanh(out @ sW0 + sb0)
    out = jnp.tanh(out @ sW1 + sb1)
    out = jnp.tanh(out @ sWo + sbo)
    return out


# ------------------------------ param init -----------------------------------
def init_params(key):
    ks = jax.random.split(key, 12)

    def lin(kw, shape_in_out):
        fan_in = shape_in_out[0]
        return jax.random.normal(kw, shape_in_out, jnp.float32) / jnp.sqrt(float(fan_in))

    pW0 = lin(ks[0], (PARAM_I_DIM, PARAM_HIDDEN[0]))
    pb0 = 0.1 * jax.random.normal(ks[1], (1, PARAM_HIDDEN[0]), jnp.float32)
    pW1 = lin(ks[2], (PARAM_HIDDEN[0], PARAM_HIDDEN[1]))
    pb1 = 0.1 * jax.random.normal(ks[3], (1, PARAM_HIDDEN[1]), jnp.float32)
    pWl = lin(ks[4], (PARAM_HIDDEN[1], LATENT_DIM))
    pbl = 0.1 * jax.random.normal(ks[5], (1, LATENT_DIM), jnp.float32)

    sW0 = lin(ks[6], (GEN_UNIT, SHAPE_HIDDEN[0]))
    sb0 = 0.1 * jax.random.normal(ks[7], (1, SHAPE_HIDDEN[0]), jnp.float32)
    sW1 = lin(ks[8], (SHAPE_HIDDEN[0], SHAPE_HIDDEN[1]))
    sb1 = 0.1 * jax.random.normal(ks[9], (1, SHAPE_HIDDEN[1]), jnp.float32)
    sWo = lin(ks[10], (SHAPE_HIDDEN[1], SHAPE_O_DIM))
    sbo = 0.1 * jax.random.normal(ks[11], (1, SHAPE_O_DIM), jnp.float32)

    return (pW0, pb0, pW1, pb1, pWl, pbl, sW0, sb0, sW1, sb1, sWo, sbo)


# ---------------------------------- main --------------------------------------
if __name__ == "__main__":
    key = jax.random.PRNGKey(0)
    k_x, k_p = jax.random.split(key)
    params = init_params(k_p)
    x = jax.random.normal(k_x, (BATCH, D_IN), jnp.float32)

    # One-time preprocessing (outside the hot path): fuse + pack all weights.
    slab = jax.block_until_ready(pack_params(params))

    out = jax.block_until_ready(nif_forward(x, slab))

    ref = jax.block_until_ready(nif_reference(x, params))
    assert out.shape == (BATCH, SHAPE_O_DIM)
    assert jnp.allclose(out, ref, atol=1e-4, rtol=1e-4), (
        f"max abs err {jnp.max(jnp.abs(out - ref))}")

    print("KERNEL_OK")
</pallas_src>

<mosaic_0001>
module attributes {stable_mosaic.version = 11 : i64} {
  func.func @nif_kernel(%arg0: i32, %arg1: memref<64x5xf32, #tpu.memory_space<vmem>>, %arg2: memref<200x128xf32, #tpu.memory_space<vmem>>, %arg3: memref<64x3xf32, #tpu.memory_space<vmem>>) attributes {dimension_semantics = [#tpu.dimension_semantics<parallel>], iteration_bounds = array<i64: 1>, scalar_prefetch = 0 : i64, scratch_operands = 0 : i64, tpu.core_type = #tpu.core_type<tc>, window_params = [{transform_indices = @transform_0, window_bounds = array<i64: 64, 5>}, {pipeline_mode = #tpu.pipeline_mode<synchronous>, transform_indices = @transform_1, window_bounds = array<i64: 200, 128>}, {transform_indices = @transform_2, window_bounds = array<i64: 64, 3>}]} {
    %c0 = arith.constant 0 : index
    %c0_0 = arith.constant 0 : index
    %0 = vector.load %arg1[%c0, %c0_0] : memref<64x5xf32, #tpu.memory_space<vmem>>, vector<64x5xf32>
    %1 = vector.extract_strided_slice %0 {offsets = [0, 0], sizes = [64, 2], strides = [1, 1]} : vector<64x5xf32> to vector<64x2xf32>
    %2 = vector.extract_strided_slice %0 {offsets = [0, 2], sizes = [64, 3], strides = [1, 1]} : vector<64x5xf32> to vector<64x3xf32>
    %c0_1 = arith.constant 0 : index
    %c0_2 = arith.constant 0 : index
    %3 = vector.load %arg2[%c0_1, %c0_2] : memref<200x128xf32, #tpu.memory_space<vmem>>, vector<3x32xf32>
    %cst = arith.constant dense<0.000000e+00> : vector<64x32xf32>
    %4 = tpu.matmul %2, %3, %cst {dimension_numbers = #tpu.dot_dimension_numbers<[1], [0], [0], [1], [0, 0, 1, 1], [], []>} : vector<64x3xf32>, vector<3x32xf32>, vector<64x32xf32> -> vector<64x32xf32>
    %c8 = arith.constant 8 : index
    %c0_3 = arith.constant 0 : index
    %5 = vector.load %arg2[%c8, %c0_3] : memref<200x128xf32, #tpu.memory_space<vmem>>, vector<1x32xf32>
    %6 = vector.broadcast %5 : vector<1x32xf32> to vector<64x32xf32>
    %7 = arith.addf %4, %6 : vector<64x32xf32>
    %8 = math.tanh %7 : vector<64x32xf32>
    %c16 = arith.constant 16 : index
    %c0_4 = arith.constant 0 : index
    %9 = vector.load %arg2[%c16, %c0_4] : memref<200x128xf32, #tpu.memory_space<vmem>>, vector<32x32xf32>
    %cst_5 = arith.constant dense<0.000000e+00> : vector<64x32xf32>
    %10 = tpu.matmul %8, %9, %cst_5 {dimension_numbers = #tpu.dot_dimension_numbers<[1], [0], [0], [1], [0, 0, 1, 1], [], []>} : vector<64x32xf32>, vector<32x32xf32>, vector<64x32xf32> -> vector<64x32xf32>
    %c48 = arith.constant 48 : index
    %c0_6 = arith.constant 0 : index
    %11 = vector.load %arg2[%c48, %c0_6] : memref<200x128xf32, #tpu.memory_space<vmem>>, vector<1x32xf32>
    %12 = vector.broadcast %11 : vector<1x32xf32> to vector<64x32xf32>
    %13 = arith.addf %10, %12 : vector<64x32xf32>
    %14 = math.tanh %13 : vector<64x32xf32>
    %c56 = arith.constant 56 : index
    %c0_7 = arith.constant 0 : index
    %15 = vector.load %arg2[%c56, %c0_7] : memref<200x128xf32, #tpu.memory_space<vmem>>, vector<32x48xf32>
    %cst_8 = arith.constant dense<0.000000e+00> : vector<64x48xf32>
    %16 = tpu.matmul %14, %15, %cst_8 {dimension_numbers = #tpu.dot_dimension_numbers<[1], [0], [0], [1], [0, 0, 1, 1], [], []>} : vector<64x32xf32>, vector<32x48xf32>, vector<64x48xf32> -> vector<64x48xf32>
    %c88 = arith.constant 88 : index
    %c0_9 = arith.constant 0 : index
    %17 = vector.load %arg2[%c88, %c0_9] : memref<200x128xf32, #tpu.memory_space<vmem>>, vector<1x48xf32>
    %18 = vector.broadcast %17 : vector<1x48xf32> to vector<64x48xf32>
    %19 = arith.addf %16, %18 : vector<64x48xf32>
    %20 = math.tanh %19 : vector<64x48xf32>
    %21 = vector.extract_strided_slice %20 {offsets = [0, 32], sizes = [64, 16], strides = [1, 1]} : vector<64x48xf32> to vector<64x16xf32>
    %22 = vector.extract_strided_slice %20 {offsets = [0, 0], sizes = [64, 16], strides = [1, 1]} : vector<64x48xf32> to vector<64x16xf32>
    %23 = vector.extract_strided_slice %1 {offsets = [0, 0], sizes = [64, 1], strides = [1, 1]} : vector<64x2xf32> to vector<64x1xf32>
    %24 = vector.broadcast %23 : vector<64x1xf32> to vector<64x16xf32>
    %25 = arith.mulf %22, %24 : vector<64x16xf32>
    %26 = arith.addf %21, %25 : vector<64x16xf32>
    %27 = vector.extract_strided_slice %20 {offsets = [0, 16], sizes = [64, 16], strides = [1, 1]} : vector<64x48xf32> to vector<64x16xf32>
    %28 = vector.extract_strided_slice %1 {offsets = [0, 1], sizes = [64, 1], strides = [1, 1]} : vector<64x2xf32> to vector<64x1xf32>
    %29 = vector.broadcast %28 : vector<64x1xf32> to vector<64x16xf32>
    %30 = arith.mulf %27, %29 : vector<64x16xf32>
    %31 = arith.addf %26, %30 : vector<64x16xf32>
    %32 = math.tanh %31 : vector<64x16xf32>
    %c96 = arith.constant 96 : index
    %c0_10 = arith.constant 0 : index
    %33 = vector.load %arg2[%c96, %c0_10] : memref<200x128xf32, #tpu.memory_space<vmem>>, vector<16x32xf32>
    %cst_11 = arith.constant dense<0.000000e+00> : vector<64x32xf32>
    %34 = tpu.matmul %32, %33, %cst_11 {dimension_numbers = #tpu.dot_dimension_numbers<[1], [0], [0], [1], [0, 0, 1, 1], [], []>} : vector<64x16xf32>, vector<16x32xf32>, vector<64x32xf32> -> vector<64x32xf32>
    %c112 = arith.constant 112 : index
    %c0_12 = arith.constant 0 : index
    %35 = vector.load %arg2[%c112, %c0_12] : memref<200x128xf32, #tpu.memory_space<vmem>>, vector<1x32xf32>
    %36 = vector.broadcast %35 : vector<1x32xf32> to vector<64x32xf32>
    %37 = arith.addf %34, %36 : vector<64x32xf32>
    %38 = math.tanh %37 : vector<64x32xf32>
    %c120 = arith.constant 120 : index
    %c0_13 = arith.constant 0 : index
    %39 = vector.load %arg2[%c120, %c0_13] : memref<200x128xf32, #tpu.memory_space<vmem>>, vector<32x32xf32>
    %cst_14 = arith.constant dense<0.000000e+00> : vector<64x32xf32>
    %40 = tpu.matmul %38, %39, %cst_14 {dimension_numbers = #tpu.dot_dimension_numbers<[1], [0], [0], [1], [0, 0, 1, 1], [], []>} : vector<64x32xf32>, vector<32x32xf32>, vector<64x32xf32> -> vector<64x32xf32>
    %c152 = arith.constant 152 : index
    %c0_15 = arith.constant 0 : index
    %41 = vector.load %arg2[%c152, %c0_15] : memref<200x128xf32, #tpu.memory_space<vmem>>, vector<1x32xf32>
    %42 = vector.broadcast %41 : vector<1x32xf32> to vector<64x32xf32>
    %43 = arith.addf %40, %42 : vector<64x32xf32>
    %44 = math.tanh %43 : vector<64x32xf32>
    %c160 = arith.constant 160 : index
    %c0_16 = arith.constant 0 : index
    %45 = vector.load %arg2[%c160, %c0_16] : memref<200x128xf32, #tpu.memory_space<vmem>>, vector<32x3xf32>
    %cst_17 = arith.constant dense<0.000000e+00> : vector<64x3xf32>
    %46 = tpu.matmul %44, %45, %cst_17 {dimension_numbers = #tpu.dot_dimension_numbers<[1], [0], [0], [1], [0, 0, 1, 1], [], []>} : vector<64x32xf32>, vector<32x3xf32>, vector<64x3xf32> -> vector<64x3xf32>
    %c192 = arith.constant 192 : index
    %c0_18 = arith.constant 0 : index
    %47 = vector.load %arg2[%c192, %c0_18] : memref<200x128xf32, #tpu.memory_space<vmem>>, vector<1x3xf32>
    %48 = vector.broadcast %47 : vector<1x3xf32> to vector<64x3xf32>
    %49 = arith.addf %46, %48 : vector<64x3xf32>
    %50 = math.tanh %49 : vector<64x3xf32>
    %c0_19 = arith.constant 0 : index
    %c0_20 = arith.constant 0 : index
    %51 = vector.load %arg3[%c0_19, %c0_20] : memref<64x3xf32, #tpu.memory_space<vmem>>, vector<64x3xf32>
    tpu.vector_store %arg3[%c0_19, %c0_20], %50 {strides = array<i32>} : memref<64x3xf32, #tpu.memory_space<vmem>>, vector<64x3xf32>,
    return
  }
  func.func @transform_0(%arg0: i32) -> (i32, i32) {
    %c0_i32 = arith.constant 0 : i32
    %c0_i32_0 = arith.constant 0 : i32
    return %arg0, %c0_i32 : i32, i32
  }
  func.func @transform_1(%arg0: i32) -> (i32, i32) {
    %c0_i32 = arith.constant 0 : i32
    %c0_i32_0 = arith.constant 0 : i32
    %c0_i32_1 = arith.constant 0 : i32
    return %c0_i32, %c0_i32_0 : i32, i32
  }
  func.func @transform_2(%arg0: i32) -> (i32, i32) {
    %c0_i32 = arith.constant 0 : i32
    %c0_i32_0 = arith.constant 0 : i32
    return %arg0, %c0_i32 : i32, i32
  }
}

</mosaic_0001>

<llo_original>
// kernel: nif_forward.1
$region0: #{nif_forward.1}
  #allocation0 [shape = 'u32[]', space=smem, size = 0x4, offset = 0x4, fixed_abs, tag = 'smem constant byte address 0x4 - core index']
  #allocation1 [shape = 'u32[144,128]{1,0:T(1,128)}', space=vmem, size = 0x12000, scoped, tag = 'internal scratch']
  %s0 = inlined_call_operand.vmem [shape: f32[64,5], index: 0, kind: input, shape index: {}]
  %s1 = inlined_call_operand.hbm [shape: f32[200,128], index: 1, kind: input, shape index: {}]
  %s2 = inlined_call_operand.vmem [shape: f32[64,3], index: 2, kind: output, shape index: {}]
  %s3 = sld [smem:[#allocation0]]
  $region22: #{nif_forward.1} parent=0
    _
  %s5 = ssub.s32 1, %s3
  %s6 = scalar_select 0, %s5, %s3
  $region1: #{nif_forward.1} parent=0
    #allocation2 [shape = 'u8[102400]{0}', space=vmem, size = 0x19000, scoped, tag = 'input window, operand 1, single buffered']
    #allocation3 [shape = 's32[1]{0}', space=sflag, size = 0x4, scoped, tag = 'scoped memory for nif_forward.1']
    %7 = vsyncpa [#allocation3], 0
    // Predicated region
    $region2: #{nif_forward.1} parent=1 // pred_check
      _
    $region3: #{nif_forward.1} parent=1 // pred_check_branch
      %9 = sbr.rel (0) target = $region5
    $region4: #{nif_forward.1} parent=1 // pred_region
      _
    $region5: #{nif_forward.1} parent=1 // pred_fallthru
      _
    // Predicated region
    $region6: #{nif_forward.1} parent=1 // pred_check
      _
    $region7: #{nif_forward.1} parent=1 // pred_check_branch
      %11 = sbr.rel (0) target = $region9
    $region8: #{nif_forward.1} parent=1 // pred_region
      %s13 = ssub.s32 3200, 3200
      %14 = vsyncadd [#allocation3], %s13
      %s15 = sshll.u32 [#allocation2], 4
      %s16 = int_to_ptr.vmem [resolvable:$true] %s15
      %21 = dma.hbm_to_vmem [thread:$0]  %s1, 3200, %s16, [#allocation3], 128, 128, 8
    $region9: #{nif_forward.1} parent=1 // pred_fallthru
      _
    // Predicated region
    $region10: #{nif_forward.1} parent=1 // pred_check
      _
    $region11: #{nif_forward.1} parent=1 // pred_check_branch
      %23 = sbr.rel (0) target = $region13
    $region12: #{nif_forward.1} parent=1 // pred_region
      %24 = dma.done [#allocation3], 3200
    $region13: #{nif_forward.1} parent=1 // pred_fallthru
      _
    %v25 = vld [vmem:[%s0] sm:$0xff]
    %v26 = vld [vmem:[%s0 + $0x8] sm:$0xff]
    %v27 = vld [vmem:[%s0 + $0x10] sm:$0xff]
    %v28 = vld [vmem:[%s0 + $0x18] sm:$0xff]
    %v29 = vld [vmem:[%s0 + $0x20] sm:$0xff]
    %v30 = vld [vmem:[%s0 + $0x28] sm:$0xff]
    %v31 = vld [vmem:[%s0 + $0x30] sm:$0xff]
    %v32 = vld [vmem:[%s0 + $0x38] sm:$0xff]
    %v33 = vld [vmem:[#allocation2] sm:$0x7]
    %v34 = vld [vmem:[#allocation2 + $0x8] sm:$0x1]
    %v35 = vlaneseq
    %v36 = vshrl.u32 %v35, 7
    %v37 = vsub.s32 0, %v36
    %v38 = vrot.slane %v34, %v37
    %47 = vrot.lane.b32.xlu0 %v25, 126
    %v48 = vpop.permute.xlu0 %47
    %49 = vrot.lane.b32.xlu0 %v26, 126
    %v50 = vpop.permute.xlu0 %49
    %51 = vrot.lane.b32.xlu0 %v27, 126
    %v52 = vpop.permute.xlu0 %51
    %53 = vrot.lane.b32.xlu0 %v28, 126
    %v54 = vpop.permute.xlu0 %53
    %55 = vrot.lane.b32.xlu0 %v29, 126
    %v56 = vpop.permute.xlu0 %55
    %57 = vrot.lane.b32.xlu0 %v30, 126
    %v58 = vpop.permute.xlu0 %57
    %59 = vrot.lane.b32.xlu0 %v31, 126
    %v60 = vpop.permute.xlu0 %59
    %61 = vrot.lane.b32.xlu0 %v32, 126
    %v62 = vpop.permute.xlu0 %61
    %vm63 = vcmask 23552
    %v64 = vsel %vm63, %v48, 0
    %v66 = vsel %vm63, %v50, 0
    %v68 = vsel %vm63, %v52, 0
    %v70 = vsel %vm63, %v54, 0
    %v72 = vsel %vm63, %v56, 0
    %v74 = vsel %vm63, %v58, 0
    %v76 = vsel %vm63, %v60, 0
    %v78 = vsel %vm63, %v62, 0
    %vm80 = vcmask 1042432
    %v82 = vsel %vm80, %v33, 0
    %84 = vmatprep.subr.mxu0 0.0
    %85 = vmatpush1.msra.mxu0 0.0
    %86 = vmatprep.subr.mxu0 0.0
    %87 = vmatpush1.msra.mxu0 0.0
    %88 = vmatprep.subr.mxu0 0.0
    %89 = vmatpush1.msra.mxu0 0.0
    %90 = vmatprep.subr.mxu0 0.0
    %91 = vmatpush1.msra.mxu0 0.0
    %92 = vmatprep.subr.mxu0 0.0
    %93 = vmatpush1.msra.mxu0 0.0
    %94 = vmatprep.subr.mxu0 0.0
    %95 = vmatpush1.msra.mxu0 0.0
    %96 = vmatprep.subr.mxu0 0.0
    %97 = vmatpush1.msra.mxu0 0.0
    %98 = vmatprep.subr.mxu0 0.0
    %99 = vmatpush1.msra.mxu0 0.0
    %100 = vmatprep.subr.mxu0 0.0
    %101 = vmatpush1.msra.mxu0 0.0
    %102 = vmatprep.subr.mxu0 0.0
    %103 = vmatpush1.msra.mxu0 0.0
    %104 = vmatprep.subr.mxu0 0.0
    %105 = vmatpush1.msra.mxu0 0.0
    %106 = vmatprep.subr.mxu0 0.0
    %107 = vmatpush1.msra.mxu0 0.0
    %108 = vmatprep.subr.mxu0 0.0
    %109 = vmatpush1.msra.mxu0 0.0
    %110 = vmatprep.subr.mxu0 0.0
    %111 = vmatpush1.msra.mxu0 0.0
    %112 = vmatprep.subr.mxu0 0.0
    %113 = vmatpush1.msra.mxu0 0.0
    %114 = vmatprep.subr.mxu0 0.0
    %115 = vmatpush1.msra.mxu0 %v82
    %116 = vmatprep.subr.mxu0 0.0
    %117 = vmatpush2.msra.mxu0 0.0
    %118 = vmatprep.subr.mxu0 0.0
    %119 = vmatpush2.msra.mxu0 0.0
    %120 = vmatprep.subr.mxu0 0.0
    %121 = vmatpush2.msra.mxu0 0.0
    %122 = vmatprep.subr.mxu0 0.0
    %123 = vmatpush2.msra.mxu0 0.0
    %124 = vmatprep.subr.mxu0 0.0
    %125 = vmatpush2.msra.mxu0 0.0
    %126 = vmatprep.subr.mxu0 0.0
    %127 = vmatpush2.msra.mxu0 0.0
    %128 = vmatprep.subr.mxu0 0.0
    %129 = vmatpush2.msra.mxu0 0.0
    %130 = vmatprep.subr.mxu0 0.0
    %131 = vmatpush2.msra.mxu0 0.0
    %132 = vmatprep.subr.mxu0 0.0
    %133 = vmatpush2.msra.mxu0 0.0
    %134 = vmatprep.subr.mxu0 0.0
    %135 = vmatpush2.msra.mxu0 0.0
    %136 = vmatprep.subr.mxu0 0.0
    %137 = vmatpush2.msra.mxu0 0.0
    %138 = vmatprep.subr.mxu0 0.0
    %139 = vmatpush2.msra.mxu0 0.0
    %140 = vmatprep.subr.mxu0 0.0
    %141 = vmatpush2.msra.mxu0 0.0
    %142 = vmatprep.subr.mxu0 0.0
    %143 = vmatpush2.msra.mxu0 0.0
    %144 = vmatprep.subr.mxu0 0.0
    %145 = vmatpush2.msra.mxu0 0.0
    %146 = vmatprep.subr.mxu0 0.0
    %147 = vmatpush2.msra.mxu0 0.0
    %148 = vmatprep.mubr.f32.mxu0 0.0
    %149 = vmatmul.mubr.f32.gmra.mxu0 %v64
    %v150 = vpop.f32.mrf.mxu0
    %v151 = vadd.f32 %v38, %v150
    %v152 = vpop.f32.mrf.mxu0
    %153 = vmatprep.mubr.f32.mxu0 0.0
    %154 = vmatmul.mubr.f32.gmra.mxu0 %v66
    %v155 = vpop.f32.mrf.mxu0
    %v156 = vadd.f32 %v38, %v155
    %v157 = vpop.f32.mrf.mxu0
    %158 = vmatprep.mubr.f32.mxu0 0.0
    %159 = vmatmul.mubr.f32.gmra.mxu0 %v68
    %v160 = vpop.f32.mrf.mxu0
    %v161 = vadd.f32 %v38, %v160
    %v162 = vpop.f32.mrf.mxu0
    %163 = vmatprep.mubr.f32.mxu0 0.0
    %164 = vmatmul.mubr.f32.gmra.mxu0 %v70
    %v165 = vpop.f32.mrf.mxu0
    %v166 = vadd.f32 %v38, %v165
    %v167 = vpop.f32.mrf.mxu0
    %168 = vmatprep.mubr.f32.mxu0 0.0
    %169 = vmatmul.mubr.f32.gmra.mxu0 %v72
    %v170 = vpop.f32.mrf.mxu0
    %v171 = vadd.f32 %v38, %v170
    %v172 = vpop.f32.mrf.mxu0
    %173 = vmatprep.mubr.f32.mxu0 0.0
    %174 = vmatmul.mubr.f32.gmra.mxu0 %v74
    %v175 = vpop.f32.mrf.mxu0
    %v176 = vadd.f32 %v38, %v175
    %v177 = vpop.f32.mrf.mxu0
    %178 = vmatprep.mubr.f32.mxu0 0.0
    %179 = vmatmul.mubr.f32.gmra.mxu0 %v76
    %v180 = vpop.f32.mrf.mxu0
    %v181 = vadd.f32 %v38, %v180
    %v182 = vpop.f32.mrf.mxu0
    %183 = vmatprep.mubr.f32.mxu0 0.0
    %184 = vmatmul.mubr.f32.gmra.mxu0 %v78
    %v185 = vpop.f32.mrf.mxu0
    %v186 = vadd.f32 %v38, %v185
    %v187 = vpop.f32.mrf.mxu0
    %188 = vdwg.mxu0
    %v189 = vtanh.pop %v151
    %v190 = vtanh.pop %v156
    %v191 = vtanh.pop %v161
    %v192 = vtanh.pop %v166
    %v193 = vtanh.pop %v171
    %v194 = vtanh.pop %v176
    %v195 = vtanh.pop %v181
    %v196 = vtanh.pop %v186
    %v197 = vld [vmem:[#allocation2 + $0x10] sm:$0xff]
    %v198 = vld [vmem:[#allocation2 + $0x18] sm:$0xff]
    %v199 = vld [vmem:[#allocation2 + $0x20] sm:$0xff]
    %v200 = vld [vmem:[#allocation2 + $0x28] sm:$0xff]
    %v201 = vld [vmem:[#allocation2 + $0x30] sm:$0x1]
    %v202 = vlaneseq
    %v203 = vshrl.u32 %v202, 7
    %v204 = vsub.s32 0, %v203
    %v205 = vrot.slane %v201, %v204
    %vm206 = vcmask 261120
    %v208 = vsel %vm206, %v189, 0
    %v211 = vsel %vm206, %v190, 0
    %v214 = vsel %vm206, %v191, 0
    %v217 = vsel %vm206, %v192, 0
    %v220 = vsel %vm206, %v193, 0
    %v223 = vsel %vm206, %v194, 0
    %v226 = vsel %vm206, %v195, 0
    %v229 = vsel %vm206, %v196, 0
    %231 = vmatprep.subr.mxu0 0.0
    %232 = vmatpush1.msra.mxu0 0.0
    %233 = vmatprep.subr.mxu0 0.0
    %234 = vmatpush1.msra.mxu0 0.0
    %235 = vmatprep.subr.mxu0 0.0
    %236 = vmatpush1.msra.mxu0 0.0
    %237 = vmatprep.subr.mxu0 0.0
    %238 = vmatpush1.msra.mxu0 0.0
    %239 = vmatprep.subr.mxu0 0.0
    %240 = vmatpush1.msra.mxu0 0.0
    %241 = vmatprep.subr.mxu0 0.0
    %242 = vmatpush1.msra.mxu0 0.0
    %243 = vmatprep.subr.mxu0 0.0
    %244 = vmatpush1.msra.mxu0 0.0
    %245 = vmatprep.subr.mxu0 0.0
    %246 = vmatpush1.msra.mxu0 0.0
    %247 = vmatprep.subr.mxu0 0.0
    %248 = vmatpush1.msra.mxu0 0.0
    %249 = vmatprep.subr.mxu0 0.0
    %250 = vmatpush1.msra.mxu0 0.0
    %251 = vmatprep.subr.mxu0 0.0
    %252 = vmatpush1.msra.mxu0 0.0
    %253 = vmatprep.subr.mxu0 0.0
    %254 = vmatpush1.msra.mxu0 0.0
    %255 = vmatprep.subr.mxu0 0.0
    %256 = vmatpush1.msra.mxu0 %v200
    %257 = vmatprep.subr.mxu0 0.0
    %258 = vmatpush1.msra.mxu0 %v199
    %259 = vmatprep.subr.mxu0 0.0
    %260 = vmatpush1.msra.mxu0 %v198
    %261 = vmatprep.subr.mxu0 0.0
    %262 = vmatpush1.msra.mxu0 %v197
    %263 = vmatprep.subr.mxu0 0.0
    %264 = vmatpush2.msra.mxu0 0.0
    %265 = vmatprep.subr.mxu0 0.0
    %266 = vmatpush2.msra.mxu0 0.0
    %267 = vmatprep.subr.mxu0 0.0
    %268 = vmatpush2.msra.mxu0 0.0
    %269 = vmatprep.subr.mxu0 0.0
    %270 = vmatpush2.msra.mxu0 0.0
    %271 = vmatprep.subr.mxu0 0.0
    %272 = vmatpush2.msra.mxu0 0.0
    %273 = vmatprep.subr.mxu0 0.0
    %274 = vmatpush2.msra.mxu0 0.0
    %275 = vmatprep.subr.mxu0 0.0
    %276 = vmatpush2.msra.mxu0 0.0
    %277 = vmatprep.subr.mxu0 0.0
    %278 = vmatpush2.msra.mxu0 0.0
    %279 = vmatprep.subr.mxu0 0.0
    %280 = vmatpush2.msra.mxu0 0.0
    %281 = vmatprep.subr.mxu0 0.0
    %282 = vmatpush2.msra.mxu0 0.0
    %283 = vmatprep.subr.mxu0 0.0
    %284 = vmatpush2.msra.mxu0 0.0
    %285 = vmatprep.subr.mxu0 0.0
    %286 = vmatpush2.msra.mxu0 0.0
    %287 = vmatprep.subr.mxu0 0.0
    %288 = vmatpush2.msra.mxu0 0.0
    %289 = vmatprep.subr.mxu0 0.0
    %290 = vmatpush2.msra.mxu0 0.0
    %291 = vmatprep.subr.mxu0 0.0
    %292 = vmatpush2.msra.mxu0 0.0
    %293 = vmatprep.subr.mxu0 0.0
    %294 = vmatpush2.msra.mxu0 0.0
    %295 = vmatprep.mubr.f32.mxu0 0.0
    %296 = vmatmul.mubr.f32.gmra.mxu0 %v208
    %v297 = vpop.f32.mrf.mxu0
    %v298 = vadd.f32 %v205, %v297
    %v299 = vpop.f32.mrf.mxu0
    %300 = vmatprep.mubr.f32.mxu0 0.0
    %301 = vmatmul.mubr.f32.gmra.mxu0 %v211
    %v302 = vpop.f32.mrf.mxu0
    %v303 = vadd.f32 %v205, %v302
    %v304 = vpop.f32.mrf.mxu0
    %305 = vmatprep.mubr.f32.mxu0 0.0
    %306 = vmatmul.mubr.f32.gmra.mxu0 %v214
    %v307 = vpop.f32.mrf.mxu0
    %v308 = vadd.f32 %v205, %v307
    %v309 = vpop.f32.mrf.mxu0
    %310 = vmatprep.mubr.f32.mxu0 0.0
    %311 = vmatmul.mubr.f32.gmra.mxu0 %v217
    %v312 = vpop.f32.mrf.mxu0
    %v313 = vadd.f32 %v205, %v312
    %v314 = vpop.f32.mrf.mxu0
    %315 = vmatprep.mubr.f32.mxu0 0.0
    %316 = vmatmul.mubr.f32.gmra.mxu0 %v220
    %v317 = vpop.f32.mrf.mxu0
    %v318 = vadd.f32 %v205, %v317
    %v319 = vpop.f32.mrf.mxu0
    %320 = vmatprep.mubr.f32.mxu0 0.0
    %321 = vmatmul.mubr.f32.gmra.mxu0 %v223
    %v322 = vpop.f32.mrf.mxu0
    %v323 = vadd.f32 %v205, %v322
    %v324 = vpop.f32.mrf.mxu0
    %325 = vmatprep.mubr.f32.mxu0 0.0
    %326 = vmatmul.mubr.f32.gmra.mxu0 %v226
    %v327 = vpop.f32.mrf.mxu0
    %v328 = vadd.f32 %v205, %v327
    %v329 = vpop.f32.mrf.mxu0
    %330 = vmatprep.mubr.f32.mxu0 0.0
    %331 = vmatmul.mubr.f32.gmra.mxu0 %v229
    %v332 = vpop.f32.mrf.mxu0
    %v333 = vadd.f32 %v205, %v332
    %v334 = vpop.f32.mrf.mxu0
    %335 = vdwg.mxu0
    %v336 = vtanh.pop %v298
    %v337 = vtanh.pop %v303
    %v338 = vtanh.pop %v308
    %v339 = vtanh.pop %v313
    %v340 = vtanh.pop %v318
    %v341 = vtanh.pop %v323
    %v342 = vtanh.pop %v328
    %v343 = vtanh.pop %v333
    %v344 = vld [vmem:[#allocation2 + $0x38] sm:$0xff]
    %v345 = vld [vmem:[#allocation2 + $0x40] sm:$0xff]
    %v346 = vld [vmem:[#allocation2 + $0x48] sm:$0xff]
    %v347 = vld [vmem:[#allocation2 + $0x50] sm:$0xff]
    %v348 = vld [vmem:[#allocation2 + $0x58] sm:$0x1]
    %v349 = vlaneseq
    %v350 = vshrl.u32 %v349, 7
    %v351 = vsub.s32 0, %v350
    %v352 = vrot.slane %v348, %v351
    %v354 = vsel %vm206, %v336, 0
    %v357 = vsel %vm206, %v337, 0
    %v360 = vsel %vm206, %v338, 0
    %v363 = vsel %vm206, %v339, 0
    %v366 = vsel %vm206, %v340, 0
    %v369 = vsel %vm206, %v341, 0
    %v372 = vsel %vm206, %v342, 0
    %v375 = vsel %vm206, %v343, 0
    %377 = vmatprep.subr.mxu0 0.0
    %378 = vmatpush1.msra.mxu0 0.0
    %379 = vmatprep.subr.mxu0 0.0
    %380 = vmatpush1.msra.mxu0 0.0
    %381 = vmatprep.subr.mxu0 0.0
    %382 = vmatpush1.msra.mxu0 0.0
    %383 = vmatprep.subr.mxu0 0.0
    %384 = vmatpush1.msra.mxu0 0.0
    %385 = vmatprep.subr.mxu0 0.0
    %386 = vmatpush1.msra.mxu0 0.0
    %387 = vmatprep.subr.mxu0 0.0
    %388 = vmatpush1.msra.mxu0 0.0
    %389 = vmatprep.subr.mxu0 0.0
    %390 = vmatpush1.msra.mxu0 0.0
    %391 = vmatprep.subr.mxu0 0.0
    %392 = vmatpush1.msra.mxu0 0.0
    %393 = vmatprep.subr.mxu0 0.0
    %394 = vmatpush1.msra.mxu0 0.0
    %395 = vmatprep.subr.mxu0 0.0
    %396 = vmatpush1.msra.mxu0 0.0
    %397 = vmatprep.subr.mxu0 0.0
    %398 = vmatpush1.msra.mxu0 0.0
    %399 = vmatprep.subr.mxu0 0.0
    %400 = vmatpush1.msra.mxu0 0.0
    %401 = vmatprep.subr.mxu0 0.0
    %402 = vmatpush1.msra.mxu0 %v347
    %403 = vmatprep.subr.mxu0 0.0
    %404 = vmatpush1.msra.mxu0 %v346
    %405 = vmatprep.subr.mxu0 0.0
    %406 = vmatpush1.msra.mxu0 %v345
    %407 = vmatprep.subr.mxu0 0.0
    %408 = vmatpush1.msra.mxu0 %v344
    %409 = vmatprep.subr.mxu0 0.0
    %410 = vmatpush2.msra.mxu0 0.0
    %411 = vmatprep.subr.mxu0 0.0
    %412 = vmatpush2.msra.mxu0 0.0
    %413 = vmatprep.subr.mxu0 0.0
    %414 = vmatpush2.msra.mxu0 0.0
    %415 = vmatprep.subr.mxu0 0.0
    %416 = vmatpush2.msra.mxu0 0.0
    %417 = vmatprep.subr.mxu0 0.0
    %418 = vmatpush2.msra.mxu0 0.0
    %419 = vmatprep.subr.mxu0 0.0
    %420 = vmatpush2.msra.mxu0 0.0
    %421 = vmatprep.subr.mxu0 0.0
    %422 = vmatpush2.msra.mxu0 0.0
    %423 = vmatprep.subr.mxu0 0.0
    %424 = vmatpush2.msra.mxu0 0.0
    %425 = vmatprep.subr.mxu0 0.0
    %426 = vmatpush2.msra.mxu0 0.0
    %427 = vmatprep.subr.mxu0 0.0
    %428 = vmatpush2.msra.mxu0 0.0
    %429 = vmatprep.subr.mxu0 0.0
    %430 = vmatpush2.msra.mxu0 0.0
    %431 = vmatprep.subr.mxu0 0.0
    %432 = vmatpush2.msra.mxu0 0.0
    %433 = vmatprep.subr.mxu0 0.0
    %434 = vmatpush2.msra.mxu0 0.0
    %435 = vmatprep.subr.mxu0 0.0
    %436 = vmatpush2.msra.mxu0 0.0
    %437 = vmatprep.subr.mxu0 0.0
    %438 = vmatpush2.msra.mxu0 0.0
    %439 = vmatprep.subr.mxu0 0.0
    %440 = vmatpush2.msra.mxu0 0.0
    %441 = vmatprep.mubr.f32.mxu0 0.0
    %442 = vmatmul.mubr.f32.gmra.mxu0 %v354
    %v443 = vpop.f32.mrf.mxu0
    %v444 = vadd.f32 %v352, %v443
    %v445 = vpop.f32.mrf.mxu0
    %446 = vmatprep.mubr.f32.mxu0 0.0
    %447 = vmatmul.mubr.f32.gmra.mxu0 %v357
    %v448 = vpop.f32.mrf.mxu0
    %v449 = vadd.f32 %v352, %v448
    %v450 = vpop.f32.mrf.mxu0
    %451 = vmatprep.mubr.f32.mxu0 0.0
    %452 = vmatmul.mubr.f32.gmra.mxu0 %v360
    %v453 = vpop.f32.mrf.mxu0
    %v454 = vadd.f32 %v352, %v453
    %v455 = vpop.f32.mrf.mxu0
    %456 = vmatprep.mubr.f32.mxu0 0.0
    %457 = vmatmul.mubr.f32.gmra.mxu0 %v363
    %v458 = vpop.f32.mrf.mxu0
    %v459 = vadd.f32 %v352, %v458
    %v460 = vpop.f32.mrf.mxu0
    %461 = vmatprep.mubr.f32.mxu0 0.0
    %462 = vmatmul.mubr.f32.gmra.mxu0 %v366
    %v463 = vpop.f32.mrf.mxu0
    %v464 = vadd.f32 %v352, %v463
    %v465 = vpop.f32.mrf.mxu0
    %466 = vmatprep.mubr.f32.mxu0 0.0
    %467 = vmatmul.mubr.f32.gmra.mxu0 %v369
    %v468 = vpop.f32.mrf.mxu0
    %v469 = vadd.f32 %v352, %v468
    %v470 = vpop.f32.mrf.mxu0
    %471 = vmatprep.mubr.f32.mxu0 0.0
    %472 = vmatmul.mubr.f32.gmra.mxu0 %v372
    %v473 = vpop.f32.mrf.mxu0
    %v474 = vadd.f32 %v352, %v473
    %v475 = vpop.f32.mrf.mxu0
    %476 = vmatprep.mubr.f32.mxu0 0.0
    %477 = vmatmul.mubr.f32.gmra.mxu0 %v375
    %v478 = vpop.f32.mrf.mxu0
    %v479 = vadd.f32 %v352, %v478
    %v480 = vpop.f32.mrf.mxu0
    %481 = vdwg.mxu0
    %v482 = vtanh.pop %v444
    %v483 = vtanh.pop %v449
    %v484 = vtanh.pop %v454
    %v485 = vtanh.pop %v459
    %v486 = vtanh.pop %v464
    %v487 = vtanh.pop %v469
    %v488 = vtanh.pop %v474
    %v489 = vtanh.pop %v479
    %490 = vset.pattern.permute.xlu0 0
    %491 = vperm.xlu0 %490, %v25
    %v492 = vpop.permute.xlu0 %491
    %494 = vset.pattern.permute.xlu0 0
    %495 = vperm.xlu0 %494, %v26
    %v496 = vpop.permute.xlu0 %495
    %498 = vset.pattern.permute.xlu0 0
    %499 = vperm.xlu0 %498, %v27
    %v500 = vpop.permute.xlu0 %499
    %502 = vset.pattern.permute.xlu0 0
    %503 = vperm.xlu0 %502, %v28
    %v504 = vpop.permute.xlu0 %503
    %506 = vset.pattern.permute.xlu0 0
    %507 = vperm.xlu0 %506, %v29
    %v508 = vpop.permute.xlu0 %507
    %510 = vset.pattern.permute.xlu0 0
    %511 = vperm.xlu0 %510, %v30
    %v512 = vpop.permute.xlu0 %511
    %514 = vset.pattern.permute.xlu0 0
    %515 = vperm.xlu0 %514, %v31
    %v516 = vpop.permute.xlu0 %515
    %518 = vset.pattern.permute.xlu0 0
    %519 = vperm.xlu0 %518, %v32
    %v520 = vpop.permute.xlu0 %519
    %v522 = vmul.f32 %v482, %v492
    %v523 = vmul.f32 %v483, %v496
    %v524 = vmul.f32 %v484, %v500
    %v525 = vmul.f32 %v485, %v504
    %v526 = vmul.f32 %v486, %v508
    %v527 = vmul.f32 %v487, %v512
    %v528 = vmul.f32 %v488, %v516
    %v529 = vmul.f32 %v489, %v520
    %538 = vrot.lane.b32.xlu0 %v522, 32
    %v539 = vpop.permute.xlu0 %538
    %540 = vrot.lane.b32.xlu0 %v523, 32
    %v541 = vpop.permute.xlu0 %540
    %542 = vrot.lane.b32.xlu0 %v524, 32
    %v543 = vpop.permute.xlu0 %542
    %544 = vrot.lane.b32.xlu0 %v525, 32
    %v545 = vpop.permute.xlu0 %544
    %546 = vrot.lane.b32.xlu0 %v526, 32
    %v547 = vpop.permute.xlu0 %546
    %548 = vrot.lane.b32.xlu0 %v527, 32
    %v549 = vpop.permute.xlu0 %548
    %550 = vrot.lane.b32.xlu0 %v528, 32
    %v551 = vpop.permute.xlu0 %550
    %552 = vrot.lane.b32.xlu0 %v529, 32
    %v553 = vpop.permute.xlu0 %552
    %v562 = vadd.f32 %v482, %v539
    %v563 = vadd.f32 %v483, %v541
    %v564 = vadd.f32 %v484, %v543
    %v565 = vadd.f32 %v485, %v545
    %v566 = vadd.f32 %v486, %v547
    %v567 = vadd.f32 %v487, %v549
    %v568 = vadd.f32 %v488, %v551
    %v569 = vadd.f32 %v489, %v553
    %570 = vset.pattern.permute.xlu0 1
    %571 = vperm.xlu0 %570, %v25
    %v572 = vpop.permute.xlu0 %571
    %574 = vset.pattern.permute.xlu0 1
    %575 = vperm.xlu0 %574, %v26
    %v576 = vpop.permute.xlu0 %575
    %578 = vset.pattern.permute.xlu0 1
    %579 = vperm.xlu0 %578, %v27
    %v580 = vpop.permute.xlu0 %579
    %582 = vset.pattern.permute.xlu0 1
    %583 = vperm.xlu0 %582, %v28
    %v584 = vpop.permute.xlu0 %583
    %586 = vset.pattern.permute.xlu0 1
    %587 = vperm.xlu0 %586, %v29
    %v588 = vpop.permute.xlu0 %587
    %590 = vset.pattern.permute.xlu0 1
    %591 = vperm.xlu0 %590, %v30
    %v592 = vpop.permute.xlu0 %591
    %594 = vset.pattern.permute.xlu0 1
    %595 = vperm.xlu0 %594, %v31
    %v596 = vpop.permute.xlu0 %595
    %598 = vset.pattern.permute.xlu0 1
    %599 = vperm.xlu0 %598, %v32
    %v600 = vpop.permute.xlu0 %599
    %v602 = vmul.f32 %v482, %v572
    %v603 = vmul.f32 %v483, %v576
    %v604 = vmul.f32 %v484, %v580
    %v605 = vmul.f32 %v485, %v584
    %v606 = vmul.f32 %v486, %v588
    %v607 = vmul.f32 %v487, %v592
    %v608 = vmul.f32 %v488, %v596
    %v609 = vmul.f32 %v489, %v600
    %618 = vrot.lane.b32.xlu0 %v602, 16
    %v619 = vpop.permute.xlu0 %618
    %620 = vrot.lane.b32.xlu0 %v603, 16
    %v621 = vpop.permute.xlu0 %620
    %622 = vrot.lane.b32.xlu0 %v604, 16
    %v623 = vpop.permute.xlu0 %622
    %624 = vrot.lane.b32.xlu0 %v605, 16
    %v625 = vpop.permute.xlu0 %624
    %626 = vrot.lane.b32.xlu0 %v606, 16
    %v627 = vpop.permute.xlu0 %626
    %628 = vrot.lane.b32.xlu0 %v607, 16
    %v629 = vpop.permute.xlu0 %628
    %630 = vrot.lane.b32.xlu0 %v608, 16
    %v631 = vpop.permute.xlu0 %630
    %632 = vrot.lane.b32.xlu0 %v609, 16
    %v633 = vpop.permute.xlu0 %632
    %v642 = vadd.f32 %v562, %v619
    %v643 = vadd.f32 %v563, %v621
    %v644 = vadd.f32 %v564, %v623
    %v645 = vadd.f32 %v565, %v625
    %v646 = vadd.f32 %v566, %v627
    %v647 = vadd.f32 %v567, %v629
    %v648 = vadd.f32 %v568, %v631
    %v649 = vadd.f32 %v569, %v633
    %v650 = vtanh.pop %v642
    %v651 = vtanh.pop %v643
    %v652 = vtanh.pop %v644
    %v653 = vtanh.pop %v645
    %v654 = vtanh.pop %v646
    %v655 = vtanh.pop %v647
    %v656 = vtanh.pop %v648
    %v657 = vtanh.pop %v649
    %v658 = vld [vmem:[#allocation2 + $0x60] sm:$0xff]
    %v659 = vld [vmem:[#allocation2 + $0x68] sm:$0xff]
    %v660 = vld [vmem:[#allocation2 + $0x70] sm:$0x1]
    %v661 = vlaneseq
    %v662 = vshrl.u32 %v661, 7
    %v663 = vsub.s32 0, %v662
    %v664 = vrot.slane %v660, %v663
    %673 = vrot.lane.b32.xlu0 %v650, 96
    %v674 = vpop.permute.xlu0 %673
    %675 = vrot.lane.b32.xlu0 %v651, 96
    %v676 = vpop.permute.xlu0 %675
    %677 = vrot.lane.b32.xlu0 %v652, 96
    %v678 = vpop.permute.xlu0 %677
    %679 = vrot.lane.b32.xlu0 %v653, 96
    %v680 = vpop.permute.xlu0 %679
    %681 = vrot.lane.b32.xlu0 %v654, 96
    %v682 = vpop.permute.xlu0 %681
    %683 = vrot.lane.b32.xlu0 %v655, 96
    %v684 = vpop.permute.xlu0 %683
    %685 = vrot.lane.b32.xlu0 %v656, 96
    %v686 = vpop.permute.xlu0 %685
    %687 = vrot.lane.b32.xlu0 %v657, 96
    %v688 = vpop.permute.xlu0 %687
    %vm689 = vcmask 130048
    %v690 = vsel %vm689, %v674, 0
    %v692 = vsel %vm689, %v676, 0
    %v694 = vsel %vm689, %v678, 0
    %v696 = vsel %vm689, %v680, 0
    %v698 = vsel %vm689, %v682, 0
    %v700 = vsel %vm689, %v684, 0
    %v702 = vsel %vm689, %v686, 0
    %v704 = vsel %vm689, %v688, 0
    %706 = vmatprep.subr.mxu0 0.0
    %707 = vmatpush1.msra.mxu0 0.0
    %708 = vmatprep.subr.mxu0 0.0
    %709 = vmatpush1.msra.mxu0 0.0
    %710 = vmatprep.subr.mxu0 0.0
    %711 = vmatpush1.msra.mxu0 0.0
    %712 = vmatprep.subr.mxu0 0.0
    %713 = vmatpush1.msra.mxu0 0.0
    %714 = vmatprep.subr.mxu0 0.0
    %715 = vmatpush1.msra.mxu0 0.0
    %716 = vmatprep.subr.mxu0 0.0
    %717 = vmatpush1.msra.mxu0 0.0
    %718 = vmatprep.subr.mxu0 0.0
    %719 = vmatpush1.msra.mxu0 0.0
    %720 = vmatprep.subr.mxu0 0.0
    %721 = vmatpush1.msra.mxu0 0.0
    %722 = vmatprep.subr.mxu0 0.0
    %723 = vmatpush1.msra.mxu0 0.0
    %724 = vmatprep.subr.mxu0 0.0
    %725 = vmatpush1.msra.mxu0 0.0
    %726 = vmatprep.subr.mxu0 0.0
    %727 = vmatpush1.msra.mxu0 0.0
    %728 = vmatprep.subr.mxu0 0.0
    %729 = vmatpush1.msra.mxu0 0.0
    %730 = vmatprep.subr.mxu0 0.0
    %731 = vmatpush1.msra.mxu0 0.0
    %732 = vmatprep.subr.mxu0 0.0
    %733 = vmatpush1.msra.mxu0 0.0
    %734 = vmatprep.subr.mxu0 0.0
    %735 = vmatpush1.msra.mxu0 %v659
    %736 = vmatprep.subr.mxu0 0.0
    %737 = vmatpush1.msra.mxu0 %v658
    %738 = vmatprep.subr.mxu0 0.0
    %739 = vmatpush2.msra.mxu0 0.0
    %740 = vmatprep.subr.mxu0 0.0
    %741 = vmatpush2.msra.mxu0 0.0
    %742 = vmatprep.subr.mxu0 0.0
    %743 = vmatpush2.msra.mxu0 0.0
    %744 = vmatprep.subr.mxu0 0.0
    %745 = vmatpush2.msra.mxu0 0.0
    %746 = vmatprep.subr.mxu0 0.0
    %747 = vmatpush2.msra.mxu0 0.0
    %748 = vmatprep.subr.mxu0 0.0
    %749 = vmatpush2.msra.mxu0 0.0
    %750 = vmatprep.subr.mxu0 0.0
    %751 = vmatpush2.msra.mxu0 0.0
    %752 = vmatprep.subr.mxu0 0.0
    %753 = vmatpush2.msra.mxu0 0.0
    %754 = vmatprep.subr.mxu0 0.0
    %755 = vmatpush2.msra.mxu0 0.0
    %756 = vmatprep.subr.mxu0 0.0
    %757 = vmatpush2.msra.mxu0 0.0
    %758 = vmatprep.subr.mxu0 0.0
    %759 = vmatpush2.msra.mxu0 0.0
    %760 = vmatprep.subr.mxu0 0.0
    %761 = vmatpush2.msra.mxu0 0.0
    %762 = vmatprep.subr.mxu0 0.0
    %763 = vmatpush2.msra.mxu0 0.0
    %764 = vmatprep.subr.mxu0 0.0
    %765 = vmatpush2.msra.mxu0 0.0
    %766 = vmatprep.subr.mxu0 0.0
    %767 = vmatpush2.msra.mxu0 0.0
    %768 = vmatprep.subr.mxu0 0.0
    %769 = vmatpush2.msra.mxu0 0.0
    %770 = vmatprep.mubr.f32.mxu0 0.0
    %771 = vmatmul.mubr.f32.gmra.mxu0 %v690
    %v772 = vpop.f32.mrf.mxu0
    %v773 = vadd.f32 %v664, %v772
    %v774 = vpop.f32.mrf.mxu0
    %775 = vmatprep.mubr.f32.mxu0 0.0
    %776 = vmatmul.mubr.f32.gmra.mxu0 %v692
    %v777 = vpop.f32.mrf.mxu0
    %v778 = vadd.f32 %v664, %v777
    %v779 = vpop.f32.mrf.mxu0
    %780 = vmatprep.mubr.f32.mxu0 0.0
    %781 = vmatmul.mubr.f32.gmra.mxu0 %v694
    %v782 = vpop.f32.mrf.mxu0
    %v783 = vadd.f32 %v664, %v782
    %v784 = vpop.f32.mrf.mxu0
    %785 = vmatprep.mubr.f32.mxu0 0.0
    %786 = vmatmul.mubr.f32.gmra.mxu0 %v696
    %v787 = vpop.f32.mrf.mxu0
    %v788 = vadd.f32 %v664, %v787
    %v789 = vpop.f32.mrf.mxu0
    %790 = vmatprep.mubr.f32.mxu0 0.0
    %791 = vmatmul.mubr.f32.gmra.mxu0 %v698
    %v792 = vpop.f32.mrf.mxu0
    %v793 = vadd.f32 %v664, %v792
    %v794 = vpop.f32.mrf.mxu0
    %795 = vmatprep.mubr.f32.mxu0 0.0
    %796 = vmatmul.mubr.f32.gmra.mxu0 %v700
    %v797 = vpop.f32.mrf.mxu0
    %v798 = vadd.f32 %v664, %v797
    %v799 = vpop.f32.mrf.mxu0
    %800 = vmatprep.mubr.f32.mxu0 0.0
    %801 = vmatmul.mubr.f32.gmra.mxu0 %v702
    %v802 = vpop.f32.mrf.mxu0
    %v803 = vadd.f32 %v664, %v802
    %v804 = vpop.f32.mrf.mxu0
    %805 = vmatprep.mubr.f32.mxu0 0.0
    %806 = vmatmul.mubr.f32.gmra.mxu0 %v704
    %v807 = vpop.f32.mrf.mxu0
    %v808 = vadd.f32 %v664, %v807
    %v809 = vpop.f32.mrf.mxu0
    %810 = vdwg.mxu0
    %v811 = vtanh.pop %v773
    %v812 = vtanh.pop %v778
    %v813 = vtanh.pop %v783
    %v814 = vtanh.pop %v788
    %v815 = vtanh.pop %v793
    %v816 = vtanh.pop %v798
    %v817 = vtanh.pop %v803
    %v818 = vtanh.pop %v808
    %v819 = vld [vmem:[#allocation2 + $0x78] sm:$0xff]
    %v820 = vld [vmem:[#allocation2 + $0x80] sm:$0xff]
    %v821 = vld [vmem:[#allocation2 + $0x88] sm:$0xff]
    %v822 = vld [vmem:[#allocation2 + $0x90] sm:$0xff]
    %v823 = vld [vmem:[#allocation2 + $0x98] sm:$0x1]
    %v824 = vlaneseq
    %v825 = vshrl.u32 %v824, 7
    %v826 = vsub.s32 0, %v825
    %v827 = vrot.slane %v823, %v826
    %v829 = vsel %vm206, %v811, 0
    %v832 = vsel %vm206, %v812, 0
    %v835 = vsel %vm206, %v813, 0
    %v838 = vsel %vm206, %v814, 0
    %v841 = vsel %vm206, %v815, 0
    %v844 = vsel %vm206, %v816, 0
    %v847 = vsel %vm206, %v817, 0
    %v850 = vsel %vm206, %v818, 0
    %852 = vmatprep.subr.mxu0 0.0
    %853 = vmatpush1.msra.mxu0 0.0
    %854 = vmatprep.subr.mxu0 0.0
    %855 = vmatpush1.msra.mxu0 0.0
    %856 = vmatprep.subr.mxu0 0.0
    %857 = vmatpush1.msra.mxu0 0.0
    %858 = vmatprep.subr.mxu0 0.0
    %859 = vmatpush1.msra.mxu0 0.0
    %860 = vmatprep.subr.mxu0 0.0
    %861 = vmatpush1.msra.mxu0 0.0
    %862 = vmatprep.subr.mxu0 0.0
    %863 = vmatpush1.msra.mxu0 0.0
    %864 = vmatprep.subr.mxu0 0.0
    %865 = vmatpush1.msra.mxu0 0.0
    %866 = vmatprep.subr.mxu0 0.0
    %867 = vmatpush1.msra.mxu0 0.0
    %868 = vmatprep.subr.mxu0 0.0
    %869 = vmatpush1.msra.mxu0 0.0
    %870 = vmatprep.subr.mxu0 0.0
    %871 = vmatpush1.msra.mxu0 0.0
    %872 = vmatprep.subr.mxu0 0.0
    %873 = vmatpush1.msra.mxu0 0.0
    %874 = vmatprep.subr.mxu0 0.0
    %875 = vmatpush1.msra.mxu0 0.0
    %876 = vmatprep.subr.mxu0 0.0
    %877 = vmatpush1.msra.mxu0 %v822
    %878 = vmatprep.subr.mxu0 0.0
    %879 = vmatpush1.msra.mxu0 %v821
    %880 = vmatprep.subr.mxu0 0.0
    %881 = vmatpush1.msra.mxu0 %v820
    %882 = vmatprep.subr.mxu0 0.0
    %883 = vmatpush1.msra.mxu0 %v819
    %884 = vmatprep.subr.mxu0 0.0
    %885 = vmatpush2.msra.mxu0 0.0
    %886 = vmatprep.subr.mxu0 0.0
    %887 = vmatpush2.msra.mxu0 0.0
    %888 = vmatprep.subr.mxu0 0.0
    %889 = vmatpush2.msra.mxu0 0.0
    %890 = vmatprep.subr.mxu0 0.0
    %891 = vmatpush2.msra.mxu0 0.0
    %892 = vmatprep.subr.mxu0 0.0
    %893 = vmatpush2.msra.mxu0 0.0
    %894 = vmatprep.subr.mxu0 0.0
    %895 = vmatpush2.msra.mxu0 0.0
    %896 = vmatprep.subr.mxu0 0.0
    %897 = vmatpush2.msra.mxu0 0.0
    %898 = vmatprep.subr.mxu0 0.0
    %899 = vmatpush2.msra.mxu0 0.0
    %900 = vmatprep.subr.mxu0 0.0
    %901 = vmatpush2.msra.mxu0 0.0
    %902 = vmatprep.subr.mxu0 0.0
    %903 = vmatpush2.msra.mxu0 0.0
    %904 = vmatprep.subr.mxu0 0.0
    %905 = vmatpush2.msra.mxu0 0.0
    %906 = vmatprep.subr.mxu0 0.0
    %907 = vmatpush2.msra.mxu0 0.0
    %908 = vmatprep.subr.mxu0 0.0
    %909 = vmatpush2.msra.mxu0 0.0
    %910 = vmatprep.subr.mxu0 0.0
    %911 = vmatpush2.msra.mxu0 0.0
    %912 = vmatprep.subr.mxu0 0.0
    %913 = vmatpush2.msra.mxu0 0.0
    %914 = vmatprep.subr.mxu0 0.0
    %915 = vmatpush2.msra.mxu0 0.0
    %916 = vmatprep.mubr.f32.mxu0 0.0
    %917 = vmatmul.mubr.f32.gmra.mxu0 %v829
    %v918 = vpop.f32.mrf.mxu0
    %v919 = vadd.f32 %v827, %v918
    %v920 = vpop.f32.mrf.mxu0
    %921 = vmatprep.mubr.f32.mxu0 0.0
    %922 = vmatmul.mubr.f32.gmra.mxu0 %v832
    %v923 = vpop.f32.mrf.mxu0
    %v924 = vadd.f32 %v827, %v923
    %v925 = vpop.f32.mrf.mxu0
    %926 = vmatprep.mubr.f32.mxu0 0.0
    %927 = vmatmul.mubr.f32.gmra.mxu0 %v835
    %v928 = vpop.f32.mrf.mxu0
    %v929 = vadd.f32 %v827, %v928
    %v930 = vpop.f32.mrf.mxu0
    %931 = vmatprep.mubr.f32.mxu0 0.0
    %932 = vmatmul.mubr.f32.gmra.mxu0 %v838
    %v933 = vpop.f32.mrf.mxu0
    %v934 = vadd.f32 %v827, %v933
    %v935 = vpop.f32.mrf.mxu0
    %936 = vmatprep.mubr.f32.mxu0 0.0
    %937 = vmatmul.mubr.f32.gmra.mxu0 %v841
    %v938 = vpop.f32.mrf.mxu0
    %v939 = vadd.f32 %v827, %v938
    %v940 = vpop.f32.mrf.mxu0
    %941 = vmatprep.mubr.f32.mxu0 0.0
    %942 = vmatmul.mubr.f32.gmra.mxu0 %v844
    %v943 = vpop.f32.mrf.mxu0
    %v944 = vadd.f32 %v827, %v943
    %v945 = vpop.f32.mrf.mxu0
    %946 = vmatprep.mubr.f32.mxu0 0.0
    %947 = vmatmul.mubr.f32.gmra.mxu0 %v847
    %v948 = vpop.f32.mrf.mxu0
    %v949 = vadd.f32 %v827, %v948
    %v950 = vpop.f32.mrf.mxu0
    %951 = vmatprep.mubr.f32.mxu0 0.0
    %952 = vmatmul.mubr.f32.gmra.mxu0 %v850
    %v953 = vpop.f32.mrf.mxu0
    %v954 = vadd.f32 %v827, %v953
    %v955 = vpop.f32.mrf.mxu0
    %956 = vdwg.mxu0
    %v957 = vtanh.pop %v919
    %v958 = vtanh.pop %v924
    %v959 = vtanh.pop %v929
    %v960 = vtanh.pop %v934
    %v961 = vtanh.pop %v939
    %v962 = vtanh.pop %v944
    %v963 = vtanh.pop %v949
    %v964 = vtanh.pop %v954
    %v965 = vld [vmem:[#allocation2 + $0xa0] sm:$0xff]
    %v966 = vld [vmem:[#allocation2 + $0xa8] sm:$0xff]
    %v967 = vld [vmem:[#allocation2 + $0xb0] sm:$0xff]
    %v968 = vld [vmem:[#allocation2 + $0xb8] sm:$0xff]
    %v969 = vld [vmem:[#allocation2 + $0xc0] sm:$0x1]
    %v970 = vlaneseq
    %v971 = vshrl.u32 %v970, 7
    %v972 = vsub.s32 0, %v971
    %v973 = vrot.slane %v969, %v972
    %v975 = vsel %vm206, %v957, 0
    %v978 = vsel %vm206, %v958, 0
    %v981 = vsel %vm206, %v959, 0
    %v984 = vsel %vm206, %v960, 0
    %v987 = vsel %vm206, %v961, 0
    %v990 = vsel %vm206, %v962, 0
    %v993 = vsel %vm206, %v963, 0
    %v996 = vsel %vm206, %v964, 0
    %998 = vmatprep.subr.mxu0 0.0
    %999 = vmatpush1.msra.mxu0 0.0
    %1000 = vmatprep.subr.mxu0 0.0
    %1001 = vmatpush1.msra.mxu0 0.0
    %1002 = vmatprep.subr.mxu0 0.0
    %1003 = vmatpush1.msra.mxu0 0.0
    %1004 = vmatprep.subr.mxu0 0.0
    %1005 = vmatpush1.msra.mxu0 0.0
    %1006 = vmatprep.subr.mxu0 0.0
    %1007 = vmatpush1.msra.mxu0 0.0
    %1008 = vmatprep.subr.mxu0 0.0
    %1009 = vmatpush1.msra.mxu0 0.0
    %1010 = vmatprep.subr.mxu0 0.0
    %1011 = vmatpush1.msra.mxu0 0.0
    %1012 = vmatprep.subr.mxu0 0.0
    %1013 = vmatpush1.msra.mxu0 0.0
    %1014 = vmatprep.subr.mxu0 0.0
    %1015 = vmatpush1.msra.mxu0 0.0
    %1016 = vmatprep.subr.mxu0 0.0
    %1017 = vmatpush1.msra.mxu0 0.0
    %1018 = vmatprep.subr.mxu0 0.0
    %1019 = vmatpush1.msra.mxu0 0.0
    %1020 = vmatprep.subr.mxu0 0.0
    %1021 = vmatpush1.msra.mxu0 0.0
    %1022 = vmatprep.subr.mxu0 0.0
    %1023 = vmatpush1.msra.mxu0 %v968
    %1024 = vmatprep.subr.mxu0 0.0
    %1025 = vmatpush1.msra.mxu0 %v967
    %1026 = vmatprep.subr.mxu0 0.0
    %1027 = vmatpush1.msra.mxu0 %v966
    %1028 = vmatprep.subr.mxu0 0.0
    %1029 = vmatpush1.msra.mxu0 %v965
    %1030 = vmatprep.subr.mxu0 0.0
    %1031 = vmatpush2.msra.mxu0 0.0
    %1032 = vmatprep.subr.mxu0 0.0
    %1033 = vmatpush2.msra.mxu0 0.0
    %1034 = vmatprep.subr.mxu0 0.0
    %1035 = vmatpush2.msra.mxu0 0.0
    %1036 = vmatprep.subr.mxu0 0.0
    %1037 = vmatpush2.msra.mxu0 0.0
    %1038 = vmatprep.subr.mxu0 0.0
    %1039 = vmatpush2.msra.mxu0 0.0
    %1040 = vmatprep.subr.mxu0 0.0
    %1041 = vmatpush2.msra.mxu0 0.0
    %1042 = vmatprep.subr.mxu0 0.0
    %1043 = vmatpush2.msra.mxu0 0.0
    %1044 = vmatprep.subr.mxu0 0.0
    %1045 = vmatpush2.msra.mxu0 0.0
    %1046 = vmatprep.subr.mxu0 0.0
    %1047 = vmatpush2.msra.mxu0 0.0
    %1048 = vmatprep.subr.mxu0 0.0
    %1049 = vmatpush2.msra.mxu0 0.0
    %1050 = vmatprep.subr.mxu0 0.0
    %1051 = vmatpush2.msra.mxu0 0.0
    %1052 = vmatprep.subr.mxu0 0.0
    %1053 = vmatpush2.msra.mxu0 0.0
    %1054 = vmatprep.subr.mxu0 0.0
    %1055 = vmatpush2.msra.mxu0 0.0
    %1056 = vmatprep.subr.mxu0 0.0
    %1057 = vmatpush2.msra.mxu0 0.0
    %1058 = vmatprep.subr.mxu0 0.0
    %1059 = vmatpush2.msra.mxu0 0.0
    %1060 = vmatprep.subr.mxu0 0.0
    %1061 = vmatpush2.msra.mxu0 0.0
    %1062 = vmatprep.mubr.f32.mxu0 0.0
    %1063 = vmatmul.mubr.f32.gmra.mxu0 %v975
    %v1064 = vpop.f32.mrf.mxu0
    %v1065 = vadd.f32 %v973, %v1064
    %v1066 = vpop.f32.mrf.mxu0
    %1067 = vmatprep.mubr.f32.mxu0 0.0
    %1068 = vmatmul.mubr.f32.gmra.mxu0 %v978
    %v1069 = vpop.f32.mrf.mxu0
    %v1070 = vadd.f32 %v973, %v1069
    %v1071 = vpop.f32.mrf.mxu0
    %1072 = vmatprep.mubr.f32.mxu0 0.0
    %1073 = vmatmul.mubr.f32.gmra.mxu0 %v981
    %v1074 = vpop.f32.mrf.mxu0
    %v1075 = vadd.f32 %v973, %v1074
    %v1076 = vpop.f32.mrf.mxu0
    %1077 = vmatprep.mubr.f32.mxu0 0.0
    %1078 = vmatmul.mubr.f32.gmra.mxu0 %v984
    %v1079 = vpop.f32.mrf.mxu0
    %v1080 = vadd.f32 %v973, %v1079
    %v1081 = vpop.f32.mrf.mxu0
    %1082 = vmatprep.mubr.f32.mxu0 0.0
    %1083 = vmatmul.mubr.f32.gmra.mxu0 %v987
    %v1084 = vpop.f32.mrf.mxu0
    %v1085 = vadd.f32 %v973, %v1084
    %v1086 = vpop.f32.mrf.mxu0
    %1087 = vmatprep.mubr.f32.mxu0 0.0
    %1088 = vmatmul.mubr.f32.gmra.mxu0 %v990
    %v1089 = vpop.f32.mrf.mxu0
    %v1090 = vadd.f32 %v973, %v1089
    %v1091 = vpop.f32.mrf.mxu0
    %1092 = vmatprep.mubr.f32.mxu0 0.0
    %1093 = vmatmul.mubr.f32.gmra.mxu0 %v993
    %v1094 = vpop.f32.mrf.mxu0
    %v1095 = vadd.f32 %v973, %v1094
    %v1096 = vpop.f32.mrf.mxu0
    %1097 = vmatprep.mubr.f32.mxu0 0.0
    %1098 = vmatmul.mubr.f32.gmra.mxu0 %v996
    %v1099 = vpop.f32.mrf.mxu0
    %v1100 = vadd.f32 %v973, %v1099
    %v1101 = vpop.f32.mrf.mxu0
    %1102 = vdwg.mxu0
    %v1103 = vtanh.pop %v1065
    %v1104 = vtanh.pop %v1070
    %v1105 = vtanh.pop %v1075
    %v1106 = vtanh.pop %v1080
    %v1107 = vtanh.pop %v1085
    %v1108 = vtanh.pop %v1090
    %v1109 = vtanh.pop %v1095
    %v1110 = vtanh.pop %v1100
    %1111 = vst.msk [vmem:[%s2] sm:$0xff] %vm63, %v1103
    %1112 = vst.msk [vmem:[%s2 + $0x8] sm:$0xff] %vm63, %v1104
    %1113 = vst.msk [vmem:[%s2 + $0x10] sm:$0xff] %vm63, %v1105
    %1114 = vst.msk [vmem:[%s2 + $0x18] sm:$0xff] %vm63, %v1106
    %1115 = vst.msk [vmem:[%s2 + $0x20] sm:$0xff] %vm63, %v1107
    %1116 = vst.msk [vmem:[%s2 + $0x28] sm:$0xff] %vm63, %v1108
    %1117 = vst.msk [vmem:[%s2 + $0x30] sm:$0xff] %vm63, %v1109
    %1118 = vst.msk [vmem:[%s2 + $0x38] sm:$0xff] %vm63, %v1110
    // Predicated region
    $region14: #{nif_forward.1} parent=1 // pred_check
      _
    $region15: #{nif_forward.1} parent=1 // pred_check_branch
      %1120 = sbr.rel (0) target = $region17
    $region16: #{nif_forward.1} parent=1 // pred_region
      _
    $region17: #{nif_forward.1} parent=1 // pred_fallthru
      _
    // Predicated region
    $region18: #{nif_forward.1} parent=1 // pred_check
      _
    $region19: #{nif_forward.1} parent=1 // pred_check_branch
      %1122 = sbr.rel (0) target = $region21
    $region20: #{nif_forward.1} parent=1 // pred_region
      _
    $region21: #{nif_forward.1} parent=1 // pred_fallthru
      _
    %1123 = vsyncpa [#allocation3], 1

</llo_original>
